<compile_context>
chip_gen: v7x
topology: tpu7x:2x2x1
jax: 0.10.0
libtpu: 0.0.40
codegen_flags: <defaults>
</compile_context>

<pallas_src>
import numpy as np
import jax
import jax.numpy as jnp
from jax.experimental import pallas as pl
from jax.experimental.pallas import tpu as pltpu


def _adaptive_pool_matrix(in_size: int, out_size: int) -> np.ndarray:
    """Row i averages input indices [floor(i*in/out), ceil((i+1)*in/out))."""
    P = np.zeros((out_size, in_size), dtype=np.float32)
    for i in range(out_size):
        start = (i * in_size) // out_size
        end = -((-(i + 1) * in_size) // out_size)  # ceil((i+1)*in/out)
        P[i, start:end] = 1.0 / float(end - start)
    return P


def _vmem_capacity_bytes() -> int:
    """Per-core VMEM capacity; conservative v7x fallback if unqueryable."""
    try:
        info = pltpu.get_tpu_info()
        cap = getattr(info, "vmem_capacity_bytes", None)
        if isinstance(cap, (int, np.integer)) and int(cap) > 0:
            return int(cap)
    except Exception:
        pass
    return 64 * 1024 * 1024  # v7x per-TC VMEM (smallest current generation)


def _num_tensorcores() -> int:
    """TensorCores per chip; fall back to 1 (no grid split) if unknown."""
    try:
        info = pltpu.get_tpu_info()
        for attr in ("num_cores", "num_tensorcores", "tensorcore_count",
                     "cores_per_chip"):
            n = getattr(info, attr, None)
            if isinstance(n, (int, np.integer)) and int(n) > 0:
                return int(n)
    except Exception:
        pass
    return 1


def _pool_matmul_kernel(x_ref, pk_ref, o_ref):
    # x_ref : (nblk, HW)   native-layout chunk of flattened input planes (streams)
    # pk_ref: (HW, HoWo)   small pooling-weight matrix (MXU weight, resident)
    # o_ref : (nblk, HoWo) pooled output chunk
    o_ref[...] = jnp.dot(
        x_ref[...], pk_ref[...], preferred_element_type=jnp.float32
    ).astype(o_ref.dtype)


def adaptive_avg_pool2d_pallas(x: jax.Array, out_hw, *, nblk_max: int = 8192) -> jax.Array:
    """Adaptive average pool of an NCHW tensor to (Ho, Wo) via a Pallas matmul."""
    B, C, H, W = x.shape
    Ho, Wo = out_hw
    N, HW, HoWo = B * C, H * W, Ho * Wo
    dtype = x.dtype
    itemsize = jnp.dtype(dtype).itemsize

    # Pooling weights, pre-transposed to (HW, HoWo); kept in f32 (compute is not
    # the bottleneck and this keeps window reciprocals like 1/3, 1/6 unbiased).
    pk = jnp.asarray(
        np.kron(_adaptive_pool_matrix(H, Ho), _adaptive_pool_matrix(W, Wo)).T,
        dtype=jnp.float32)

    # Free reshape of the contiguous NCHW tensor -- no transpose, no extra HBM pass.
    x2 = x.reshape(N, HW)

    # Per-chip VMEM budget: one input tile gets ~1/5 of the scoped limit so that
    # double-buffered inputs + double-buffered outputs + pk fit comfortably
    # (v7x: 48 MiB limit -> <=~9.6 MiB input tile; v5e/v6e get proportionally more).
    vmem_cap = _vmem_capacity_bytes()
    vmem_limit = int(min(vmem_cap * 3 // 4, 96 * 1024 * 1024))
    in_budget = vmem_limit // 5
    row_bytes = HW * itemsize

    fit_rows = max(8, (in_budget // max(row_bytes, 1)) // 8 * 8)
    nblk = min(int(nblk_max), fit_rows)
    if nblk >= N:
        # Everything fits in one step.  Only split across steps on multi-TC chips
        # and only when each step still moves >= ~1 MiB (else overhead dominates).
        nblk = N
        tc = _num_tensorcores()
        if tc > 1:
            share = -(-N // tc)
            share = ((share + 7) // 8) * 8
            if share < N and share * row_bytes >= (1 << 20):
                nblk = share
    else:
        # Tiled path: multiples of 256 rows preferred (MXU width), 8 minimum.
        nblk = (nblk // 256) * 256 if nblk >= 256 else (nblk // 8) * 8
        nblk = max(nblk, 8)

    grid = (pl.cdiv(N, nblk),)

    cost = pl.CostEstimate(
        flops=2 * N * HW * HoWo,
        transcendentals=0,
        bytes_accessed=N * HW * itemsize + N * HoWo * itemsize + HW * HoWo * 4,
    )

    out = pl.pallas_call(
        _pool_matmul_kernel,
        out_shape=jax.ShapeDtypeStruct((N, HoWo), dtype),
        grid=grid,
        in_specs=[
            pl.BlockSpec((nblk, HW), lambda i: (i, 0)),    # streaming input rows
            pl.BlockSpec((HW, HoWo), lambda i: (0, 0)),    # resident pooling matrix
        ],
        out_specs=pl.BlockSpec((nblk, HoWo), lambda i: (i, 0)),
        compiler_params=pltpu.CompilerParams(
            dimension_semantics=("parallel",),
            vmem_limit_bytes=vmem_limit,
        ),
        cost_estimate=cost,
    )(x2, pk)

    # Free reshape: rows are already ordered (b, c), cols (ho, wo).
    return out.reshape(B, C, Ho, Wo)


def pyramid_pool_agg(inputs, stride: int) -> jax.Array:
    """JAX/Pallas equivalent of PyramidPoolAgg.forward (inputs: list of NCHW arrays)."""
    B, C, H, W = inputs[-1].shape
    Ho = (H - 1) // stride + 1
    Wo = (W - 1) // stride + 1
    pooled = [adaptive_avg_pool2d_pallas(inp, (Ho, Wo)) for inp in inputs]
    # TODO(synk): fuse the per-level kernels + concat into a single pallas_call
    # that writes each level's pooled block into its channel-offset slice.
    return jnp.concatenate(pooled, axis=1)


def _reference_adaptive_pool(x, out_hw):
    """Pure-JAX reference (explicit window averaging) for correctness check."""
    B, C, H, W = x.shape
    Ho, Wo = out_hw
    rows = []
    for i in range(Ho):
        hs, he = (i * H) // Ho, -((-(i + 1) * H) // Ho)
        cols = []
        for j in range(Wo):
            ws, we = (j * W) // Wo, -((-(j + 1) * W) // Wo)
            cols.append(jnp.mean(x[:, :, hs:he, ws:we], axis=(2, 3)))
        rows.append(jnp.stack(cols, axis=-1))
    return jnp.stack(rows, axis=-2)


if __name__ == "__main__":
    key = jax.random.PRNGKey(0)
    k0, k1, k2, k3, k4 = jax.random.split(key, 5)

    # Small pyramid of NCHW feature maps, consistent with PyramidPoolAgg usage.
    x0 = jax.random.normal(k0, (2, 4, 16, 16), dtype=jnp.float32)
    x1 = jax.random.normal(k1, (2, 8, 8, 8), dtype=jnp.float32)
    x2 = jax.random.normal(k2, (2, 16, 4, 4), dtype=jnp.float32)
    inputs = [x0, x1, x2]
    stride = 2  # -> (Ho, Wo) = ((4-1)//2+1, (4-1)//2+1) = (2, 2)

    out = jax.block_until_ready(pyramid_pool_agg(inputs, stride))
    assert out.shape == (2, 28, 2, 2), out.shape
    ref = jnp.concatenate(
        [_reference_adaptive_pool(x, (2, 2)) for x in inputs], axis=1)
    np.testing.assert_allclose(np.asarray(out), np.asarray(ref),
                               rtol=1e-5, atol=1e-5)

    # Tiled path, N divisible by the tile (N=256, nblk=128, grid=2).
    xa = jax.random.normal(k3, (2, 128, 16, 16), dtype=jnp.float32)
    out_a = jax.block_until_ready(
        adaptive_avg_pool2d_pallas(xa, (4, 4), nblk_max=128))
    assert out_a.shape == (2, 128, 4, 4), out_a.shape
    np.testing.assert_allclose(np.asarray(out_a),
                               np.asarray(_reference_adaptive_pool(xa, (4, 4))),
                               rtol=1e-5, atol=1e-5)

    # Tiled path with a partial (non-divisible) final block, no host-side pad
    # (N=400, nblk=256, grid=2, last block covers only 144 valid rows).
    xb = jax.random.normal(k4, (2, 200, 16, 16), dtype=jnp.float32)
    out_b = jax.block_until_ready(
        adaptive_avg_pool2d_pallas(xb, (4, 4), nblk_max=256))
    assert out_b.shape == (2, 200, 4, 4), out_b.shape
    np.testing.assert_allclose(np.asarray(out_b),
                               np.asarray(_reference_adaptive_pool(xb, (4, 4))),
                               rtol=1e-5, atol=1e-5)

    print("KERNEL_OK")
</pallas_src>

<mosaic_0001>
module attributes {stable_mosaic.version = 11 : i64} {
  func.func @_pool_matmul_kernel(%arg0: i32, %arg1: memref<8x256xf32, #tpu.memory_space<vmem>>, %arg2: memref<256x4xf32, #tpu.memory_space<vmem>>, %arg3: memref<8x4xf32, #tpu.memory_space<vmem>>) attributes {dimension_semantics = [#tpu.dimension_semantics<parallel>], iteration_bounds = array<i64: 1>, scalar_prefetch = 0 : i64, scratch_operands = 0 : i64, tpu.core_type = #tpu.core_type<tc>, window_params = [{transform_indices = @transform_0, window_bounds = array<i64: 8, 256>}, {pipeline_mode = #tpu.pipeline_mode<synchronous>, transform_indices = @transform_1, window_bounds = array<i64: 256, 4>}, {transform_indices = @transform_2, window_bounds = array<i64: 8, 4>}]} {
    %c0 = arith.constant 0 : index
    %c0_0 = arith.constant 0 : index
    %0 = vector.load %arg1[%c0, %c0_0] : memref<8x256xf32, #tpu.memory_space<vmem>>, vector<8x256xf32>
    %c0_1 = arith.constant 0 : index
    %c0_2 = arith.constant 0 : index
    %1 = vector.load %arg2[%c0_1, %c0_2] : memref<256x4xf32, #tpu.memory_space<vmem>>, vector<256x4xf32>
    %cst = arith.constant dense<0.000000e+00> : vector<8x4xf32>
    %2 = tpu.matmul %0, %1, %cst {dimension_numbers = #tpu.dot_dimension_numbers<[1], [0], [0], [1], [0, 0, 1, 1], [], []>} : vector<8x256xf32>, vector<256x4xf32>, vector<8x4xf32> -> vector<8x4xf32>
    %c0_3 = arith.constant 0 : index
    %c0_4 = arith.constant 0 : index
    %3 = vector.load %arg3[%c0_3, %c0_4] : memref<8x4xf32, #tpu.memory_space<vmem>>, vector<8x4xf32>
    tpu.vector_store %arg3[%c0_3, %c0_4], %2 {strides = array<i32>} : memref<8x4xf32, #tpu.memory_space<vmem>>, vector<8x4xf32>,
    return
  }
  func.func @transform_0(%arg0: i32) -> (i32, i32) {
    %c0_i32 = arith.constant 0 : i32
    %c0_i32_0 = arith.constant 0 : i32
    return %arg0, %c0_i32 : i32, i32
  }
  func.func @transform_1(%arg0: i32) -> (i32, i32) {
    %c0_i32 = arith.constant 0 : i32
    %c0_i32_0 = arith.constant 0 : i32
    %c0_i32_1 = arith.constant 0 : i32
    return %c0_i32, %c0_i32_0 : i32, i32
  }
  func.func @transform_2(%arg0: i32) -> (i32, i32) {
    %c0_i32 = arith.constant 0 : i32
    %c0_i32_0 = arith.constant 0 : i32
    return %arg0, %c0_i32 : i32, i32
  }
}

</mosaic_0001>

<llo_original>
// kernel: tpu_custom_call.1
$region0: #{tpu_custom_call.1}
  #allocation0 [shape = 'u32[]', space=smem, size = 0x4, offset = 0x4, fixed_abs, tag = 'smem constant byte address 0x4 - core index']
  #allocation1 [shape = 'u32[144,128]{1,0:T(1,128)}', space=vmem, size = 0x12000, scoped, tag = 'internal scratch']
  %s0 = inlined_call_operand.vmem [shape: f32[8,256], index: 0, kind: input, shape index: {}]
  %s1 = inlined_call_operand.vmem [shape: f32[256,4], index: 1, kind: input, shape index: {}]
  %s2 = inlined_call_operand.vmem [shape: f32[8,4], index: 2, kind: output, shape index: {}]
  %s3 = sld [smem:[#allocation0]]
  $region18: #{tpu_custom_call.1} parent=0
    _
  %s5 = ssub.s32 1, %s3
  %s6 = scalar_select 0, %s5, %s3
  // Predicated region
  $region2: #{tpu_custom_call.1} parent=0 // pred_check
    _
  $region3: #{tpu_custom_call.1} parent=0 // pred_check_branch
    %8 = sbr.rel (0) target = $region5
  $region4: #{tpu_custom_call.1} parent=0 // pred_region
    _
  $region5: #{tpu_custom_call.1} parent=0 // pred_fallthru
    _
  // Predicated region
  $region6: #{tpu_custom_call.1} parent=0 // pred_check
    _
  $region7: #{tpu_custom_call.1} parent=0 // pred_check_branch
    %10 = sbr.rel (0) target = $region9
  $region8: #{tpu_custom_call.1} parent=0 // pred_region
    _
  $region9: #{tpu_custom_call.1} parent=0 // pred_fallthru
    _
  %v11 = vld [vmem:[%s0] sm:$0xff]
  %v12 = vld [vmem:[%s0 + $0x8] sm:$0xff]
  %v13 = vld [vmem:[%s1] sm:$0xff]
  %v14 = vld [vmem:[%s1 + $0x8] sm:$0xff]
  %v15 = vld [vmem:[%s1 + $0x10] sm:$0xff]
  %v16 = vld [vmem:[%s1 + $0x18] sm:$0xff]
  %v17 = vld [vmem:[%s1 + $0x20] sm:$0xff]
  %v18 = vld [vmem:[%s1 + $0x28] sm:$0xff]
  %v19 = vld [vmem:[%s1 + $0x30] sm:$0xff]
  %v20 = vld [vmem:[%s1 + $0x38] sm:$0xff]
  %v21 = vld [vmem:[%s1 + $0x40] sm:$0xff]
  %v22 = vld [vmem:[%s1 + $0x48] sm:$0xff]
  %v23 = vld [vmem:[%s1 + $0x50] sm:$0xff]
  %v24 = vld [vmem:[%s1 + $0x58] sm:$0xff]
  %v25 = vld [vmem:[%s1 + $0x60] sm:$0xff]
  %v26 = vld [vmem:[%s1 + $0x68] sm:$0xff]
  %v27 = vld [vmem:[%s1 + $0x70] sm:$0xff]
  %v28 = vld [vmem:[%s1 + $0x78] sm:$0xff]
  %v29 = vld [vmem:[%s1 + $0x80] sm:$0xff]
  %v30 = vld [vmem:[%s1 + $0x88] sm:$0xff]
  %v31 = vld [vmem:[%s1 + $0x90] sm:$0xff]
  %v32 = vld [vmem:[%s1 + $0x98] sm:$0xff]
  %v33 = vld [vmem:[%s1 + $0xa0] sm:$0xff]
  %v34 = vld [vmem:[%s1 + $0xa8] sm:$0xff]
  %v35 = vld [vmem:[%s1 + $0xb0] sm:$0xff]
  %v36 = vld [vmem:[%s1 + $0xb8] sm:$0xff]
  %v37 = vld [vmem:[%s1 + $0xc0] sm:$0xff]
  %v38 = vld [vmem:[%s1 + $0xc8] sm:$0xff]
  %v39 = vld [vmem:[%s1 + $0xd0] sm:$0xff]
  %v40 = vld [vmem:[%s1 + $0xd8] sm:$0xff]
  %v41 = vld [vmem:[%s1 + $0xe0] sm:$0xff]
  %v42 = vld [vmem:[%s1 + $0xe8] sm:$0xff]
  %v43 = vld [vmem:[%s1 + $0xf0] sm:$0xff]
  %v44 = vld [vmem:[%s1 + $0xf8] sm:$0xff]
  %45 = vmatprep.subr.mxu0 0.0
  %46 = vmatpush1.msra.mxu0 %v13
  %47 = vmatprep.subr.mxu0 0.0
  %48 = vmatpush1.msra.mxu0 %v14
  %49 = vmatprep.subr.mxu0 0.0
  %50 = vmatpush1.msra.mxu0 %v15
  %51 = vmatprep.subr.mxu0 0.0
  %52 = vmatpush1.msra.mxu0 %v16
  %53 = vmatprep.subr.mxu0 0.0
  %54 = vmatpush1.msra.mxu0 %v17
  %55 = vmatprep.subr.mxu0 0.0
  %56 = vmatpush1.msra.mxu0 %v18
  %57 = vmatprep.subr.mxu0 0.0
  %58 = vmatpush1.msra.mxu0 %v19
  %59 = vmatprep.subr.mxu0 0.0
  %60 = vmatpush1.msra.mxu0 %v20
  %61 = vmatprep.subr.mxu0 0.0
  %62 = vmatpush1.msra.mxu0 %v21
  %63 = vmatprep.subr.mxu0 0.0
  %64 = vmatpush1.msra.mxu0 %v22
  %65 = vmatprep.subr.mxu0 0.0
  %66 = vmatpush1.msra.mxu0 %v23
  %67 = vmatprep.subr.mxu0 0.0
  %68 = vmatpush1.msra.mxu0 %v24
  %69 = vmatprep.subr.mxu0 0.0
  %70 = vmatpush1.msra.mxu0 %v25
  %71 = vmatprep.subr.mxu0 0.0
  %72 = vmatpush1.msra.mxu0 %v26
  %73 = vmatprep.subr.mxu0 0.0
  %74 = vmatpush1.msra.mxu0 %v27
  %75 = vmatprep.subr.mxu0 0.0
  %76 = vmatpush1.msra.mxu0 %v28
  %77 = vmatprep.subr.mxu0 0.0
  %78 = vmatpush1.msra.mxu0 %v29
  %79 = vmatprep.subr.mxu0 0.0
  %80 = vmatpush1.msra.mxu0 %v30
  %81 = vmatprep.subr.mxu0 0.0
  %82 = vmatpush1.msra.mxu0 %v31
  %83 = vmatprep.subr.mxu0 0.0
  %84 = vmatpush1.msra.mxu0 %v32
  %85 = vmatprep.subr.mxu0 0.0
  %86 = vmatpush1.msra.mxu0 %v33
  %87 = vmatprep.subr.mxu0 0.0
  %88 = vmatpush1.msra.mxu0 %v34
  %89 = vmatprep.subr.mxu0 0.0
  %90 = vmatpush1.msra.mxu0 %v35
  %91 = vmatprep.subr.mxu0 0.0
  %92 = vmatpush1.msra.mxu0 %v36
  %93 = vmatprep.subr.mxu0 0.0
  %94 = vmatpush1.msra.mxu0 %v37
  %95 = vmatprep.subr.mxu0 0.0
  %96 = vmatpush1.msra.mxu0 %v38
  %97 = vmatprep.subr.mxu0 0.0
  %98 = vmatpush1.msra.mxu0 %v39
  %99 = vmatprep.subr.mxu0 0.0
  %100 = vmatpush1.msra.mxu0 %v40
  %101 = vmatprep.subr.mxu0 0.0
  %102 = vmatpush1.msra.mxu0 %v41
  %103 = vmatprep.subr.mxu0 0.0
  %104 = vmatpush1.msra.mxu0 %v42
  %105 = vmatprep.subr.mxu0 0.0
  %106 = vmatpush1.msra.mxu0 %v43
  %107 = vmatprep.subr.mxu0 0.0
  %108 = vmatpush1.msra.mxu0 %v44
  %109 = vmatprep.mubr.f32.mxu0 %v12
  %110 = vmatmul.mubr.f32.gmra.mrb[0].mxu0 %v11
  %v111 = vpop.f32.mrb[0].mxu0
  %v112 = vadd.f32 0.0, %v111
  %v113 = vpop.f32.mrb[0].mxu0
  %114 = vdwg.mxu0
  %vm115 = vcmask 31744
  %116 = vst.msk [vmem:[%s2] sm:$0xff] %vm115, %v112
  // Predicated region
  $region10: #{tpu_custom_call.1} parent=0 // pred_check
    _
  $region11: #{tpu_custom_call.1} parent=0 // pred_check_branch
    %118 = sbr.rel (0) target = $region13
  $region12: #{tpu_custom_call.1} parent=0 // pred_region
    _
  $region13: #{tpu_custom_call.1} parent=0 // pred_fallthru
    _
  // Predicated region
  $region14: #{tpu_custom_call.1} parent=0 // pred_check
    _
  $region15: #{tpu_custom_call.1} parent=0 // pred_check_branch
    %120 = sbr.rel (0) target = $region17
  $region16: #{tpu_custom_call.1} parent=0 // pred_region
    _
  $region17: #{tpu_custom_call.1} parent=0 // pred_fallthru
    _

</llo_original>
